<compile_context>
chip_gen: v5e
topology: v5e:2x2
jax: 0.10.0
libtpu: 0.0.40
codegen_flags: <defaults>
</compile_context>

<pallas_src>
import functools
import math

import jax
import jax.numpy as jnp
from jax import lax
from jax.experimental import pallas as pl
from jax.experimental.pallas import tpu as pltpu


def _arcface_kernel(x_ref, lab_ref, out_ref, acc_ref, m_ref, l_ref, tgt_ref, *,
                    scale, cos_m, sin_m, th, mm, B, C, TB, TC, NC):
    b = pl.program_id(0)      # batch tile
    p = pl.program_id(1)      # 0: accumulate sum(x^2)   1: online softmax
    c = pl.program_id(2)      # class tile

    x = x_ref[...].astype(jnp.float32)        # (TB, TC); f32 math even for bf16 inputs

    pad_c = (C % TC) != 0                     # static Python bools
    pad_b = (B % TB) != 0

    # ---------------- pass 0: per-row sum of squares over class tiles -------
    @pl.when(p == 0)
    def _pass0():
        @pl.when(c == 0)
        def _init():
            acc_ref[...] = jnp.zeros((TB, 1), jnp.float32)

        xs = x
        if pad_c:
            col = c * TC + lax.broadcasted_iota(jnp.int32, (TB, TC), 1)
            xs = jnp.where(col < C, x, 0.0)
        acc_ref[...] += jnp.sum(xs * xs, axis=1, keepdims=True)

    # ---------------- pass 1: online logsumexp + label-column margin --------
    @pl.when(p == 1)
    def _pass1():
        @pl.when(c == 0)
        def _init():
            # sum(x^2) -> scale / ||x||  (rsqrt on (TB,1), not a (TB,TC) divide)
            acc_ref[...] = scale * lax.rsqrt(acc_ref[...])
            m_ref[...] = jnp.full((TB, 1), -jnp.inf, jnp.float32)
            l_ref[...] = jnp.zeros((TB, 1), jnp.float32)
            tgt_ref[...] = jnp.zeros((TB, 1), jnp.float32)

        labels = lab_ref[...]                                  # (TB, 1) int32
        col = c * TC + lax.broadcasted_iota(jnp.int32, (TB, TC), 1)

        s = x * acc_ref[...]                                   # scale * cosine
        if pad_c:
            s = jnp.where(col < C, s, -jnp.inf)                # padded cols -> -inf

        # ArcFace margin, evaluated only at the label column of each row.
        is_label = col == labels                               # (TB, TC) bool
        s_lab = jnp.sum(jnp.where(is_label, s, 0.0), axis=1, keepdims=True)
        cos_lab = s_lab * (1.0 / scale)                        # cosine at label col
        sin_lab = jnp.sqrt(1.0 - cos_lab * cos_lab)            # (TB,1) sqrt only
        phi = cos_lab * cos_m - sin_lab * sin_m
        phi = jnp.where(cos_lab > th, phi, cos_lab - mm)
        s_phi = scale * phi                                    # (TB, 1)
        s = jnp.where(is_label, s_phi, s)                      # substitute label col

        # Remember scale*phi for the one class tile that contains each label.
        in_tile = jnp.logical_and(labels >= c * TC, labels < c * TC + TC)
        target = jnp.where(in_tile, s_phi, tgt_ref[...])
        tgt_ref[...] = target

        # Online (running max / running sum) logsumexp across class tiles.
        m_old = m_ref[...]
        m_new = jnp.maximum(m_old, jnp.max(s, axis=1, keepdims=True))
        l_new = (jnp.exp(m_old - m_new) * l_ref[...]
                 + jnp.sum(jnp.exp(s - m_new), axis=1, keepdims=True))
        m_ref[...] = m_new
        l_ref[...] = l_new

        @pl.when(c == NC - 1)
        def _finalize():
            per_row = m_new + jnp.log(l_new) - target          # CE per row
            if pad_b:
                row = b * TB + lax.broadcasted_iota(jnp.int32, (TB, 1), 0)
                per_row = jnp.where(row < B, per_row, 0.0)
            out_ref[...] = per_row


def arcface_loss(logits, labels, *, scale=128.0, margin=0.4,
                 block_b=64, block_c=2048,
                 vmem_limit_bytes=32 * 1024 * 1024):
    """Pallas implementation of ArcFaceLoss.forward (returns the scalar loss)."""
    B, C = logits.shape

    # Tile sizes: multiples of (8, 128) or the full dimension.
    TB = max(8, (block_b // 8) * 8) if B >= block_b else B
    TC = max(128, (block_c // 128) * 128) if C >= block_c else C
    nb = pl.cdiv(B, TB)
    nc = pl.cdiv(C, TC)

    cos_m = math.cos(margin)
    sin_m = math.sin(margin)
    th = math.cos(3.14159265 - margin)   # constants kept verbatim from the torch module
    mm = math.sin(3.14159265 - margin) * margin

    labels2d = labels.reshape(B, 1).astype(jnp.int32)

    kernel = functools.partial(
        _arcface_kernel, scale=float(scale), cos_m=cos_m, sin_m=sin_m,
        th=th, mm=mm, B=B, C=C, TB=TB, TC=TC, NC=nc)

    per_row = pl.pallas_call(
        kernel,
        out_shape=jax.ShapeDtypeStruct((B, 1), jnp.float32),
        grid=(nb, 2, nc),
        in_specs=[
            pl.BlockSpec((TB, TC), lambda b, p, c: (b, c)),   # logits tile
            pl.BlockSpec((TB, 1), lambda b, p, c: (b, 0)),    # labels (per batch tile)
        ],
        out_specs=pl.BlockSpec((TB, 1), lambda b, p, c: (b, 0)),
        scratch_shapes=[
            pltpu.VMEM((TB, 1), jnp.float32),   # sum(x^2) -> scale / ||x||
            pltpu.VMEM((TB, 1), jnp.float32),   # running max
            pltpu.VMEM((TB, 1), jnp.float32),   # running sum
            pltpu.VMEM((TB, 1), jnp.float32),   # scale * phi(label)
        ],
        compiler_params=pltpu.CompilerParams(
            dimension_semantics=("parallel", "arbitrary", "arbitrary"),
            vmem_limit_bytes=vmem_limit_bytes),
    )(logits, labels2d)

    # Per-batch-tile partials reduced outside the kernel (race-free on v7x megacore).
    return jnp.mean(per_row)


def _arcface_loss_ref(logits, labels, *, scale=128.0, margin=0.4):
    """Pure-JAX reference mirroring the PyTorch module."""
    cos_m = math.cos(margin)
    sin_m = math.sin(margin)
    th = math.cos(3.14159265 - margin)
    mm = math.sin(3.14159265 - margin) * margin

    cosine = logits / jnp.linalg.norm(logits, axis=1, keepdims=True)
    sine = jnp.sqrt(1.0 - cosine ** 2)
    phi = cosine * cos_m - sine * sin_m
    phi = jnp.where(cosine > th, phi, cosine - mm)
    one_hot = jax.nn.one_hot(labels, logits.shape[1], dtype=logits.dtype)
    out = (one_hot * phi + (1.0 - one_hot) * cosine) * scale
    logp = jax.nn.log_softmax(out, axis=1)
    return -jnp.mean(jnp.sum(one_hot * logp, axis=1))


if __name__ == "__main__":
    key = jax.random.PRNGKey(0)
    k1, k2 = jax.random.split(key)

    # Small shapes that still exercise batch tiling, class tiling and both
    # edge-padding paths (B=12 with TB=8, C=320 with TC=128 -> NC=3).
    B, C = 12, 320
    logits = jax.random.normal(k1, (B, C), dtype=jnp.float32)
    labels = jax.random.randint(k2, (B,), 0, C, dtype=jnp.int32)

    loss = arcface_loss(logits, labels, scale=128.0, margin=0.4,
                        block_b=8, block_c=128)
    loss = jax.block_until_ready(loss)

    ref = _arcface_loss_ref(logits, labels, scale=128.0, margin=0.4)
    assert jnp.allclose(loss, ref, rtol=1e-4, atol=1e-4), (loss, ref)

    print("KERNEL_OK")
</pallas_src>

<mosaic_0001>
module attributes {stable_mosaic.version = 11 : i64} {
  func.func @_arcface_kernel(%arg0: i32, %arg1: i32, %arg2: i32, %arg3: memref<8x128xf32, #tpu.memory_space<vmem>>, %arg4: memref<8x1xi32, #tpu.memory_space<vmem>>, %arg5: memref<8x1xf32, #tpu.memory_space<vmem>>, %arg6: memref<8x1xf32, #tpu.memory_space<vmem>>, %arg7: memref<8x1xf32, #tpu.memory_space<vmem>>, %arg8: memref<8x1xf32, #tpu.memory_space<vmem>>, %arg9: memref<8x1xf32, #tpu.memory_space<vmem>>) attributes {dimension_semantics = [#tpu.dimension_semantics<parallel>, #tpu.dimension_semantics<arbitrary>, #tpu.dimension_semantics<arbitrary>], iteration_bounds = array<i64: 2, 2, 3>, scalar_prefetch = 0 : i64, scratch_operands = 4 : i64, tpu.core_type = #tpu.core_type<tc>, window_params = [{transform_indices = @transform_0, window_bounds = array<i64: 8, 128>}, {transform_indices = @transform_1, window_bounds = array<i64: 8, 1>}, {transform_indices = @transform_2, window_bounds = array<i64: 8, 1>}]} {
    %c0 = arith.constant 0 : index
    %c0_0 = arith.constant 0 : index
    %0 = vector.load %arg3[%c0, %c0_0] : memref<8x128xf32, #tpu.memory_space<vmem>>, vector<8x128xf32>
    %c0_i32 = arith.constant 0 : i32
    %1 = arith.cmpi eq, %arg1, %c0_i32 : i32
    %2 = arith.extui %1 : i1 to i32
    %c0_i32_1 = arith.constant 0 : i32
    %3 = arith.cmpi ne, %2, %c0_i32_1 : i32
    scf.if %3 {
      %c0_i32_3 = arith.constant 0 : i32
      %7 = arith.cmpi eq, %arg2, %c0_i32_3 : i32
      %8 = arith.extui %7 : i1 to i32
      %c0_i32_4 = arith.constant 0 : i32
      %9 = arith.cmpi ne, %8, %c0_i32_4 : i32
      scf.if %9 {
        %cst_10 = arith.constant 0.000000e+00 : f32
        %24 = vector.broadcast %cst_10 : f32 to vector<8x1xf32>
        %c0_11 = arith.constant 0 : index
        %c0_12 = arith.constant 0 : index
        %25 = vector.load %arg6[%c0_11, %c0_12] : memref<8x1xf32, #tpu.memory_space<vmem>>, vector<8x1xf32>
        tpu.vector_store %arg6[%c0_11, %c0_12], %24 {strides = array<i32>} : memref<8x1xf32, #tpu.memory_space<vmem>>, vector<8x1xf32>,
      } else {
      }
      %c128_i32 = arith.constant 128 : i32
      %10 = arith.muli %arg2, %c128_i32 : i32
      %11 = tpu.iota {dimensions = array<i32: 1>} : vector<8x128xi32>
      %12 = vector.broadcast %10 : i32 to vector<8x128xi32>
      %13 = arith.addi %12, %11 : vector<8x128xi32>
      %c320_i32 = arith.constant 320 : i32
      %14 = vector.broadcast %c320_i32 : i32 to vector<8x128xi32>
      %15 = arith.cmpi slt, %13, %14 : vector<8x128xi32>
      %cst = arith.constant 0.000000e+00 : f32
      %16 = vector.broadcast %cst : f32 to vector<8x128xf32>
      %17 = arith.select %15, %0, %16 : vector<8x128xi1>, vector<8x128xf32>
      %c0_5 = arith.constant 0 : index
      %c0_6 = arith.constant 0 : index
      %18 = vector.load %arg6[%c0_5, %c0_6] : memref<8x1xf32, #tpu.memory_space<vmem>>, vector<8x1xf32>
      %19 = arith.mulf %17, %17 : vector<8x128xf32>
      %cst_7 = arith.constant dense<0.000000e+00> : vector<8xf32>
      %20 = vector.multi_reduction <add>, %19, %cst_7 [1] : vector<8x128xf32> to vector<8xf32>
      %21 = vector.shape_cast %20 : vector<8xf32> to vector<8x1xf32>
      %22 = arith.addf %18, %21 : vector<8x1xf32>
      %c0_8 = arith.constant 0 : index
      %c0_9 = arith.constant 0 : index
      %23 = vector.load %arg6[%c0_8, %c0_9] : memref<8x1xf32, #tpu.memory_space<vmem>>, vector<8x1xf32>
      tpu.vector_store %arg6[%c0_8, %c0_9], %22 {strides = array<i32>} : memref<8x1xf32, #tpu.memory_space<vmem>>, vector<8x1xf32>,
    } else {
    }
    %c1_i32 = arith.constant 1 : i32
    %4 = arith.cmpi eq, %arg1, %c1_i32 : i32
    %5 = arith.extui %4 : i1 to i32
    %c0_i32_2 = arith.constant 0 : i32
    %6 = arith.cmpi ne, %5, %c0_i32_2 : i32
    scf.if %6 {
      %c0_i32_3 = arith.constant 0 : i32
      %7 = arith.cmpi eq, %arg2, %c0_i32_3 : i32
      %8 = arith.extui %7 : i1 to i32
      %c0_i32_4 = arith.constant 0 : i32
      %9 = arith.cmpi ne, %8, %c0_i32_4 : i32
      scf.if %9 {
        %c0_36 = arith.constant 0 : index
        %c0_37 = arith.constant 0 : index
        %79 = vector.load %arg6[%c0_36, %c0_37] : memref<8x1xf32, #tpu.memory_space<vmem>>, vector<8x1xf32>
        %80 = math.rsqrt %79 : vector<8x1xf32>
        %cst_38 = arith.constant 1.280000e+02 : f32
        %81 = vector.broadcast %cst_38 : f32 to vector<8x1xf32>
        %82 = arith.mulf %81, %80 : vector<8x1xf32>
        %c0_39 = arith.constant 0 : index
        %c0_40 = arith.constant 0 : index
        %83 = vector.load %arg6[%c0_39, %c0_40] : memref<8x1xf32, #tpu.memory_space<vmem>>, vector<8x1xf32>
        tpu.vector_store %arg6[%c0_39, %c0_40], %82 {strides = array<i32>} : memref<8x1xf32, #tpu.memory_space<vmem>>, vector<8x1xf32>,
        %cst_41 = arith.constant 0xFF800000 : f32
        %84 = vector.broadcast %cst_41 : f32 to vector<8x1xf32>
        %c0_42 = arith.constant 0 : index
        %c0_43 = arith.constant 0 : index
        %85 = vector.load %arg7[%c0_42, %c0_43] : memref<8x1xf32, #tpu.memory_space<vmem>>, vector<8x1xf32>
        tpu.vector_store %arg7[%c0_42, %c0_43], %84 {strides = array<i32>} : memref<8x1xf32, #tpu.memory_space<vmem>>, vector<8x1xf32>,
        %cst_44 = arith.constant 0.000000e+00 : f32
        %86 = vector.broadcast %cst_44 : f32 to vector<8x1xf32>
        %c0_45 = arith.constant 0 : index
        %c0_46 = arith.constant 0 : index
        %87 = vector.load %arg8[%c0_45, %c0_46] : memref<8x1xf32, #tpu.memory_space<vmem>>, vector<8x1xf32>
        tpu.vector_store %arg8[%c0_45, %c0_46], %86 {strides = array<i32>} : memref<8x1xf32, #tpu.memory_space<vmem>>, vector<8x1xf32>,
        %cst_47 = arith.constant 0.000000e+00 : f32
        %88 = vector.broadcast %cst_47 : f32 to vector<8x1xf32>
        %c0_48 = arith.constant 0 : index
        %c0_49 = arith.constant 0 : index
        %89 = vector.load %arg9[%c0_48, %c0_49] : memref<8x1xf32, #tpu.memory_space<vmem>>, vector<8x1xf32>
        tpu.vector_store %arg9[%c0_48, %c0_49], %88 {strides = array<i32>} : memref<8x1xf32, #tpu.memory_space<vmem>>, vector<8x1xf32>,
      } else {
      }
      %c0_5 = arith.constant 0 : index
      %c0_6 = arith.constant 0 : index
      %10 = vector.load %arg4[%c0_5, %c0_6] : memref<8x1xi32, #tpu.memory_space<vmem>>, vector<8x1xi32>
      %c128_i32 = arith.constant 128 : i32
      %11 = arith.muli %arg2, %c128_i32 : i32
      %12 = tpu.iota {dimensions = array<i32: 1>} : vector<8x128xi32>
      %13 = vector.broadcast %11 : i32 to vector<8x128xi32>
      %14 = arith.addi %13, %12 : vector<8x128xi32>
      %c0_7 = arith.constant 0 : index
      %c0_8 = arith.constant 0 : index
      %15 = vector.load %arg6[%c0_7, %c0_8] : memref<8x1xf32, #tpu.memory_space<vmem>>, vector<8x1xf32>
      %16 = vector.broadcast %15 : vector<8x1xf32> to vector<8x128xf32>
      %17 = arith.mulf %0, %16 : vector<8x128xf32>
      %c320_i32 = arith.constant 320 : i32
      %18 = vector.broadcast %c320_i32 : i32 to vector<8x128xi32>
      %19 = arith.cmpi slt, %14, %18 : vector<8x128xi32>
      %cst = arith.constant 0xFF800000 : f32
      %20 = vector.broadcast %cst : f32 to vector<8x128xf32>
      %21 = arith.select %19, %17, %20 : vector<8x128xi1>, vector<8x128xf32>
      %22 = vector.broadcast %10 : vector<8x1xi32> to vector<8x128xi32>
      %23 = arith.cmpi eq, %14, %22 : vector<8x128xi32>
      %cst_9 = arith.constant 0.000000e+00 : f32
      %24 = vector.broadcast %cst_9 : f32 to vector<8x128xf32>
      %25 = arith.select %23, %21, %24 : vector<8x128xi1>, vector<8x128xf32>
      %cst_10 = arith.constant dense<0.000000e+00> : vector<8xf32>
      %26 = vector.multi_reduction <add>, %25, %cst_10 [1] : vector<8x128xf32> to vector<8xf32>
      %27 = vector.shape_cast %26 : vector<8xf32> to vector<8x1xf32>
      %cst_11 = arith.constant 7.812500e-03 : f32
      %28 = vector.broadcast %cst_11 : f32 to vector<8x1xf32>
      %29 = arith.mulf %27, %28 : vector<8x1xf32>
      %30 = arith.mulf %29, %29 : vector<8x1xf32>
      %cst_12 = arith.constant 1.000000e+00 : f32
      %31 = vector.broadcast %cst_12 : f32 to vector<8x1xf32>
      %32 = arith.subf %31, %30 : vector<8x1xf32>
      %33 = math.sqrt %32 : vector<8x1xf32>
      %cst_13 = arith.constant 0.921060979 : f32
      %34 = vector.broadcast %cst_13 : f32 to vector<8x1xf32>
      %35 = arith.mulf %29, %34 : vector<8x1xf32>
      %cst_14 = arith.constant 0.389418334 : f32
      %36 = vector.broadcast %cst_14 : f32 to vector<8x1xf32>
      %37 = arith.mulf %33, %36 : vector<8x1xf32>
      %38 = arith.subf %35, %37 : vector<8x1xf32>
      %cst_15 = arith.constant -0.921060979 : f32
      %39 = vector.broadcast %cst_15 : f32 to vector<8x1xf32>
      %40 = arith.cmpf ogt, %29, %39 : vector<8x1xf32>
      %cst_16 = arith.constant 0.155767336 : f32
      %41 = vector.broadcast %cst_16 : f32 to vector<8x1xf32>
      %42 = arith.subf %29, %41 : vector<8x1xf32>
      %43 = arith.select %40, %38, %42 : vector<8x1xi1>, vector<8x1xf32>
      %cst_17 = arith.constant 1.280000e+02 : f32
      %44 = vector.broadcast %cst_17 : f32 to vector<8x1xf32>
      %45 = arith.mulf %44, %43 : vector<8x1xf32>
      %46 = vector.shape_cast %45 : vector<8x1xf32> to vector<8x1xf32>
      %47 = vector.broadcast %46 : vector<8x1xf32> to vector<8x128xf32>
      %48 = arith.select %23, %47, %21 : vector<8x128xi1>, vector<8x128xf32>
      %c128_i32_18 = arith.constant 128 : i32
      %49 = arith.muli %arg2, %c128_i32_18 : i32
      %50 = vector.broadcast %49 : i32 to vector<8x1xi32>
      %51 = arith.cmpi sge, %10, %50 : vector<8x1xi32>
      %c128_i32_19 = arith.constant 128 : i32
      %52 = arith.muli %arg2, %c128_i32_19 : i32
      %c128_i32_20 = arith.constant 128 : i32
      %53 = arith.addi %52, %c128_i32_20 : i32
      %54 = vector.broadcast %53 : i32 to vector<8x1xi32>
      %55 = arith.cmpi slt, %10, %54 : vector<8x1xi32>
      %56 = arith.andi %51, %55 : vector<8x1xi1>
      %c0_21 = arith.constant 0 : index
      %c0_22 = arith.constant 0 : index
      %57 = vector.load %arg9[%c0_21, %c0_22] : memref<8x1xf32, #tpu.memory_space<vmem>>, vector<8x1xf32>
      %58 = arith.select %56, %45, %57 : vector<8x1xi1>, vector<8x1xf32>
      %c0_23 = arith.constant 0 : index
      %c0_24 = arith.constant 0 : index
      %59 = vector.load %arg9[%c0_23, %c0_24] : memref<8x1xf32, #tpu.memory_space<vmem>>, vector<8x1xf32>
      tpu.vector_store %arg9[%c0_23, %c0_24], %58 {strides = array<i32>} : memref<8x1xf32, #tpu.memory_space<vmem>>, vector<8x1xf32>,
      %c0_25 = arith.constant 0 : index
      %c0_26 = arith.constant 0 : index
      %60 = vector.load %arg7[%c0_25, %c0_26] : memref<8x1xf32, #tpu.memory_space<vmem>>, vector<8x1xf32>
      %cst_27 = arith.constant dense<0xFF800000> : vector<8xf32>
      %61 = vector.multi_reduction <maximumf>, %48, %cst_27 [1] : vector<8x128xf32> to vector<8xf32>
      %62 = vector.shape_cast %61 : vector<8xf32> to vector<8x1xf32>
      %63 = arith.maximumf %60, %62 : vector<8x1xf32>
      %64 = arith.subf %60, %63 : vector<8x1xf32>
      %65 = math.exp %64 : vector<8x1xf32>
      %c0_28 = arith.constant 0 : index
      %c0_29 = arith.constant 0 : index
      %66 = vector.load %arg8[%c0_28, %c0_29] : memref<8x1xf32, #tpu.memory_space<vmem>>, vector<8x1xf32>
      %67 = arith.mulf %65, %66 : vector<8x1xf32>
      %68 = vector.broadcast %63 : vector<8x1xf32> to vector<8x128xf32>
      %69 = arith.subf %48, %68 : vector<8x128xf32>
      %70 = math.exp %69 : vector<8x128xf32>
      %cst_30 = arith.constant dense<0.000000e+00> : vector<8xf32>
      %71 = vector.multi_reduction <add>, %70, %cst_30 [1] : vector<8x128xf32> to vector<8xf32>
      %72 = vector.shape_cast %71 : vector<8xf32> to vector<8x1xf32>
      %73 = arith.addf %67, %72 : vector<8x1xf32>
      %c0_31 = arith.constant 0 : index
      %c0_32 = arith.constant 0 : index
      %74 = vector.load %arg7[%c0_31, %c0_32] : memref<8x1xf32, #tpu.memory_space<vmem>>, vector<8x1xf32>
      tpu.vector_store %arg7[%c0_31, %c0_32], %63 {strides = array<i32>} : memref<8x1xf32, #tpu.memory_space<vmem>>, vector<8x1xf32>,
      %c0_33 = arith.constant 0 : index
      %c0_34 = arith.constant 0 : index
      %75 = vector.load %arg8[%c0_33, %c0_34] : memref<8x1xf32, #tpu.memory_space<vmem>>, vector<8x1xf32>
      tpu.vector_store %arg8[%c0_33, %c0_34], %73 {strides = array<i32>} : memref<8x1xf32, #tpu.memory_space<vmem>>, vector<8x1xf32>,
      %c2_i32 = arith.constant 2 : i32
      %76 = arith.cmpi eq, %arg2, %c2_i32 : i32
      %77 = arith.extui %76 : i1 to i32
      %c0_i32_35 = arith.constant 0 : i32
      %78 = arith.cmpi ne, %77, %c0_i32_35 : i32
      scf.if %78 {
        %79 = math.log %73 : vector<8x1xf32>
        %80 = arith.addf %63, %79 : vector<8x1xf32>
        %81 = arith.subf %80, %58 : vector<8x1xf32>
        %c8_i32 = arith.constant 8 : i32
        %82 = arith.muli %arg0, %c8_i32 : i32
        %83 = tpu.iota {dimensions = array<i32: 0>} : vector<8x1xi32>
        %84 = vector.broadcast %82 : i32 to vector<8x1xi32>
        %85 = arith.addi %84, %83 : vector<8x1xi32>
        %c12_i32 = arith.constant 12 : i32
        %86 = vector.broadcast %c12_i32 : i32 to vector<8x1xi32>
        %87 = arith.cmpi slt, %85, %86 : vector<8x1xi32>
        %cst_36 = arith.constant 0.000000e+00 : f32
        %88 = vector.broadcast %cst_36 : f32 to vector<8x1xf32>
        %89 = arith.select %87, %81, %88 : vector<8x1xi1>, vector<8x1xf32>
        %c0_37 = arith.constant 0 : index
        %c0_38 = arith.constant 0 : index
        %90 = vector.load %arg5[%c0_37, %c0_38] : memref<8x1xf32, #tpu.memory_space<vmem>>, vector<8x1xf32>
        tpu.vector_store %arg5[%c0_37, %c0_38], %89 {strides = array<i32>} : memref<8x1xf32, #tpu.memory_space<vmem>>, vector<8x1xf32>,
      } else {
      }
    } else {
    }
    return
  }
  func.func @transform_0(%arg0: i32, %arg1: i32, %arg2: i32) -> (i32, i32) {
    %c0_i32 = arith.constant 0 : i32
    return %arg0, %arg2 : i32, i32
  }
  func.func @transform_1(%arg0: i32, %arg1: i32, %arg2: i32) -> (i32, i32) {
    %c0_i32 = arith.constant 0 : i32
    %c0_i32_0 = arith.constant 0 : i32
    return %arg0, %c0_i32 : i32, i32
  }
  func.func @transform_2(%arg0: i32, %arg1: i32, %arg2: i32) -> (i32, i32) {
    %c0_i32 = arith.constant 0 : i32
    %c0_i32_0 = arith.constant 0 : i32
    return %arg0, %c0_i32 : i32, i32
  }
}

</mosaic_0001>

<llo_original>
// kernel: tpu_custom_call.1
$region0: #{tpu_custom_call.1}
  #allocation0 [shape = 'u32[]', space=smem, size = 0x4, offset = 0x4, fixed_abs, tag = 'smem constant byte address 0x4 - core index']
  #allocation1 [shape = 'u32[72,128]{1,0:T(1,128)}', space=vmem, size = 0x9000, scoped, tag = 'internal scratch']
  #allocation2 [shape = 'f32[8,1]{1,0:T(8,128)}', space=vmem, size = 0x1000, scoped, tag = 'scratch operand']
  #allocation3 [shape = 'f32[8,1]{1,0:T(8,128)}', space=vmem, size = 0x1000, scoped, tag = 'scratch operand']
  #allocation4 [shape = 'f32[8,1]{1,0:T(8,128)}', space=vmem, size = 0x1000, scoped, tag = 'scratch operand']
  #allocation5 [shape = 'f32[8,1]{1,0:T(8,128)}', space=vmem, size = 0x1000, scoped, tag = 'scratch operand']
  %s0 = inlined_call_operand.hbm [shape: f32[12,320], index: 0, kind: input, shape index: {}]
  %s1 = inlined_call_operand.vmem [shape: s32[12,1], index: 1, kind: input, shape index: {}]
  %s2 = inlined_call_operand.vmem [shape: f32[12,1], index: 2, kind: output, shape index: {}]
  %s3 = sld [smem:[#allocation0]]
  $region65: #{tpu_custom_call.1} parent=0
    _
  %s5 = ssub.s32 1, %s3
  %s6 = scalar_select 0, %s5, %s3
  $region1: #{tpu_custom_call.1} parent=0
    #allocation6 [shape = 'u8[8192]{0}', space=vmem, size = 0x2000, scoped, tag = 'input window, operand 0']
    #allocation7 [shape = 's32[2]{0}', space=sflag, size = 0x8, scoped, tag = 'scoped memory for tpu_custom_call.1']
    %7 = vsyncpa [#allocation7], 0
    %s8 = scalar_lea.sflag [#allocation7], 1
    %9 = vsyncpa %s8, 0
    loop: start=0, step=1, limit=14
    $region2: #{tpu_custom_call.1} parent=1 // loop_pre_header
      _
    $region3: #{tpu_custom_call.1} parent=1 // loop_header
      %s11 = sphi 0, %s15
      %p12 = scmp.ge.s32.totalorder %s11, 14
      %s18 = sphi 0, %s37
      %s19 = sphi 0, %s33
      %s20 = sphi 0, %s29
      %s21 = sphi 0, %s18
      %s22 = sphi 0, %s19
      %s23 = sphi 0, %s20
      %s24 = sphi 0, %s21
      %s25 = sphi 0, %s22
      %s26 = sphi 0, %s23
      %s42 = sphi 0, %s44
      %s45 = sphi 0, %s42
      %s46 = sphi 0, %s45
      %s62 = sphi 0, %s46
      %s68 = sphi 0, %s70
      %s71 = sphi 0, %s68
      %s72 = sphi 0, %s71
      %s88 = sphi 0, %s72
      %s94 = sphi 0, %s96
      %s97 = sphi 0, %s94
      %s98 = sphi 0, %s97
      %s114 = sphi 0, %s98
    $region4: #{tpu_custom_call.1} parent=1 // loop_header_branch
      %14 = sbr.rel (%p12) target = $region8
    $region5: #{tpu_custom_call.1} parent=1 // loop_body
      %s16 = ssub.s32 %s11, 1
      %s17 = ssub.s32 %s11, 2
      %s27 = sadd.s32 1, %s20
      %p28 = scmp.ge.s32.totalorder %s27, 3
      %s29 = scalar_select %p28, 0, %s27
      %s30 = sadd.s32 1, %s19
      %s31 = scalar_select %p28, %s30, %s19
      %p32 = scmp.ge.s32.totalorder %s31, 2
      %s33 = scalar_select %p32, 0, %s31
      %s34 = sadd.s32 1, %s18
      %s35 = scalar_select %p32, %s34, %s18
      %p36 = scmp.ge.s32.totalorder %s35, 2
      %s37 = scalar_select %p36, 0, %s35
      %s38 = ssub.s32 %s18, %s37
      %s39 = ssub.s32 %s20, %s29
      %s40 = sor.u32 %s38, %s39
      %p41 = scmp.eq.s32.totalorder %s40, 0
      %s43 = sadd.s32 %s42, 1
      %s44 = scalar_select %p41, %s42, %s43
      %p47 = pneg %p41
      %p48 = scmp.eq.s32.totalorder %s11, 11
      %p49 = por %p47, %p48
      %p50 = scmp.ne.s32.totalorder %s42, %s45
      %p51 = scmp.eq.s32.totalorder %s11, 0
      %p52 = por %p50, %p51
      %p53 = scmp.ne.s32.totalorder %s42, %s45
      %p54 = scmp.eq.s32.totalorder %s16, 11
      %p55 = por %p53, %p54
      %p56 = scmp.ne.s32.totalorder %s45, %s46
      %p57 = scmp.eq.s32.totalorder %s16, 0
      %p58 = por %p56, %p57
      %p59 = scmp.ne.s32.totalorder %s45, %s46
      %p60 = scmp.eq.s32.totalorder %s17, 11
      %p61 = por %p59, %p60
      %p63 = scmp.ne.s32.totalorder %s46, %s62
      %p64 = scmp.eq.s32.totalorder %s17, 0
      %p65 = por %p63, %p64
      %s66 = ssub.s32 %s18, %s37
      %p67 = scmp.eq.s32.totalorder %s66, 0
      %s69 = sadd.s32 %s68, 1
      %s70 = scalar_select %p67, %s68, %s69
      %p73 = pneg %p67
      %p74 = scmp.eq.s32.totalorder %s11, 11
      %p75 = por %p73, %p74
      %p76 = scmp.ne.s32.totalorder %s68, %s71
      %p77 = scmp.eq.s32.totalorder %s11, 0
      %p78 = por %p76, %p77
      %p79 = scmp.ne.s32.totalorder %s68, %s71
      %p80 = scmp.eq.s32.totalorder %s16, 11
      %p81 = por %p79, %p80
      %p82 = scmp.ne.s32.totalorder %s71, %s72
      %p83 = scmp.eq.s32.totalorder %s16, 0
      %p84 = por %p82, %p83
      %p85 = scmp.ne.s32.totalorder %s71, %s72
      %p86 = scmp.eq.s32.totalorder %s17, 11
      %p87 = por %p85, %p86
      %p89 = scmp.ne.s32.totalorder %s72, %s88
      %p90 = scmp.eq.s32.totalorder %s17, 0
      %p91 = por %p89, %p90
      %s92 = ssub.s32 %s18, %s37
      %p93 = scmp.eq.s32.totalorder %s92, 0
      %s95 = sadd.s32 %s94, 1
      %s96 = scalar_select %p93, %s94, %s95
      %p99 = pneg %p93
      %p100 = scmp.eq.s32.totalorder %s11, 11
      %p101 = por %p99, %p100
      %p102 = scmp.ne.s32.totalorder %s94, %s97
      %p103 = scmp.eq.s32.totalorder %s11, 0
      %p104 = por %p102, %p103
      %p105 = scmp.ne.s32.totalorder %s94, %s97
      %p106 = scmp.eq.s32.totalorder %s16, 11
      %p107 = por %p105, %p106
      %p108 = scmp.ne.s32.totalorder %s97, %s98
      %p109 = scmp.eq.s32.totalorder %s16, 0
      %p110 = por %p108, %p109
      %p111 = scmp.ne.s32.totalorder %s97, %s98
      %p112 = scmp.eq.s32.totalorder %s17, 11
      %p113 = por %p111, %p112
      %p115 = scmp.ne.s32.totalorder %s98, %s114
      %p116 = scmp.eq.s32.totalorder %s17, 0
      %p117 = por %p115, %p116
      %p118 = scmp.le.s32.totalorder 1, %s11
      %p119 = scmp.lt.s32.totalorder %s11, 13
      %p120 = pnand %p118, %p119
      %p121 = pneg %p120
      // Predicated region
      $region9: #{tpu_custom_call.1} parent=5 // pred_check
        _
      $region10: #{tpu_custom_call.1} parent=5 // pred_check_branch
        %123 = sbr.rel (%p120) target = $region12
      $region11: #{tpu_custom_call.1} parent=5 // pred_region
        %s124 = ssub.s32 %s11, 1
      $region12: #{tpu_custom_call.1} parent=5 // pred_fallthru
        _
      %p125 = scmp.lt.s32.totalorder %s11, 12
      // Predicated region
      $region13: #{tpu_custom_call.1} parent=5 // pred_check
        %p126 = pneg %p125
      $region14: #{tpu_custom_call.1} parent=5 // pred_check_branch
        %128 = sbr.rel (%p126) target = $region16
      $region15: #{tpu_custom_call.1} parent=5 // pred_region
        // Predicated region
        $region17: #{tpu_custom_call.1} parent=15 // pred_check
          %p129 = pneg %p52
        $region18: #{tpu_custom_call.1} parent=15 // pred_check_branch
          %131 = sbr.rel (%p129) target = $region20
        $region19: #{tpu_custom_call.1} parent=15 // pred_region
          %s132 = sand.u32 %s42, 1
          %s133 = scalar_lea.sflag [#allocation7], %s132
          %s134 = sand.u32 %s42, 1
          %s135 = smul.addr %s134, 8
          %s136 = scalar_lea.vmem [#allocation6], %s135
          %138 = vsyncadd %s133, 0
          %s139 = smul.addr %s18, 3
          %s140 = sadd.s32 %s20, %s139
          %s141 = smul.addr %s140, 8
          %s142 = scalar_lea.hbm %s0, %s141
          %s144 = sshll.u32 %s142, 4
          %s145 = int_to_ptr.hbm [resolvable:$true] %s144
          %s146 = sshll.u32 %s136, 4
          %s147 = int_to_ptr.vmem [resolvable:$true] %s146
          %149 = dma.hbm_to_vmem [thread:$0]  %s145, 128, %s147, %s133
        $region20: #{tpu_custom_call.1} parent=15 // pred_fallthru
          _
        // Predicated region
        $region21: #{tpu_custom_call.1} parent=15 // pred_check
          %p150 = pneg %p78
        $region22: #{tpu_custom_call.1} parent=15 // pred_check_branch
          %152 = sbr.rel (%p150) target = $region24
        $region23: #{tpu_custom_call.1} parent=15 // pred_region
          %p153 = scmp.lt.s32.totalorder %s18, 1
          %s154 = scalar_select %p153, %s18, 1
          %s155 = smul.addr %s154, 8
          %s156 = scalar_lea.vmem %s1, %s155
        $region24: #{tpu_custom_call.1} parent=15 // pred_fallthru
          _
      $region16: #{tpu_custom_call.1} parent=5 // pred_fallthru
        _
      %p157 = scmp.le.s32.totalorder 1, %s11
      %p158 = scmp.lt.s32.totalorder %s11, 13
      %p159 = pnand %p157, %p158
      %p160 = pneg %p159
      // Predicated region
      $region25: #{tpu_custom_call.1} parent=5 // pred_check
        _
      $region26: #{tpu_custom_call.1} parent=5 // pred_check_branch
        %162 = sbr.rel (%p159) target = $region28
      $region27: #{tpu_custom_call.1} parent=5 // pred_region
        %s163 = ssub.s32 %s11, 1
        %s164 = sand.u32 %s45, 1
        %s165 = scalar_lea.sflag [#allocation7], %s164
        %s166 = sand.u32 %s45, 1
        %s167 = smul.addr %s166, 8
        %s168 = scalar_lea.vmem [#allocation6], %s167
        // Predicated region
        $region29: #{tpu_custom_call.1} parent=27 // pred_check
          %p169 = pneg %p58
        $region30: #{tpu_custom_call.1} parent=27 // pred_check_branch
          %171 = sbr.rel (%p169) target = $region32
        $region31: #{tpu_custom_call.1} parent=27 // pred_region
          %173 = dma.done %s165, 128
        $region32: #{tpu_custom_call.1} parent=27 // pred_fallthru
          _
        %s174 = sand.u32 %s45, 1
        %s175 = scalar_lea.sflag [#allocation7], %s174
        %s176 = sand.u32 %s45, 1
        %s177 = smul.addr %s176, 8
        %s178 = scalar_lea.vmem [#allocation6], %s177
        %p179 = pneg %p58
        %p180 = pneg %p55
        %p181 = scmp.lt.s32.totalorder %s21, 1
        %s182 = scalar_select %p181, %s21, 1
        %s183 = smul.addr %s182, 8
        %s184 = scalar_lea.vmem %s1, %s183
        %p185 = pneg %p84
        %p186 = pneg %p81
        %p187 = pneg %p110
        %p188 = pneg %p107
        %p189 = scmp.lt.s32.totalorder %s21, 1
        %s190 = scalar_select %p189, %s21, 1
        %s191 = smul.addr %s190, 8
        %s192 = scalar_lea.vmem %s2, %s191
        %p193 = scmp.lt.s32.totalorder %s21, 1
        %s194 = scalar_select %p193, %s21, 1
        %s195 = smul.addr %s194, 8
        %s196 = scalar_lea.vmem %s1, %s195
        %p197 = scmp.lt.s32.totalorder %s21, 1
        %s198 = scalar_select %p197, %s21, 1
        %s199 = smul.addr %s198, 8
        %s200 = scalar_lea.vmem %s2, %s199
        %v201 = vld [vmem:[%s168] sm:$0xff]
        %p202 = scmp.eq.s32.totalorder %s22, 0
        // Predicated region
        $region33: #{tpu_custom_call.1} parent=27 // pred_check
          %p203 = pneg %p202
        $region34: #{tpu_custom_call.1} parent=27 // pred_check_branch
          %205 = sbr.rel (%p203) target = $region36
        $region35: #{tpu_custom_call.1} parent=27 // pred_region
          %p206 = scmp.eq.s32.totalorder %s23, 0
          // Predicated region
          $region37: #{tpu_custom_call.1} parent=35 // pred_check
            %p207 = pneg %p206
          $region38: #{tpu_custom_call.1} parent=35 // pred_check_branch
            %209 = sbr.rel (%p207) target = $region40
          $region39: #{tpu_custom_call.1} parent=35 // pred_region
            %vm210 = vcmask 7168
            %211 = vst.msk [vmem:[#allocation2] sm:$0xff] %vm210, 0.0
          $region40: #{tpu_custom_call.1} parent=35 // pred_fallthru
            _
          %s212 = smul.u32 %s23, 128
          %v213 = vlaneseq
          %v214 = vand.u32 %v213, 127
          %v215 = vstv %s212
          %v216 = vadd.s32 %v215, %v214
          %vm217 = vcmp.lt.s32.totalorder %v216, 320
          %v218 = vsel %vm217, %v201, 0.0
          %v219 = vld [vmem:[#allocation2] sm:$0xff]
          %v220 = vmul.f32 %v218, %v218
          %221 = vadd.xlane.f32.xlu0 %v220
          %v222 = vpop.xlane.xlu0 %221
          %v223 = vadd.f32 %v219, %v222
          %vm224 = vcmask 7168
          %225 = vst.msk [vmem:[#allocation2] sm:$0xff] %vm224, %v223
        $region36: #{tpu_custom_call.1} parent=27 // pred_fallthru
          _
        %p226 = scmp.eq.s32.totalorder %s22, 1
        // Predicated region
        $region41: #{tpu_custom_call.1} parent=27 // pred_check
          %p227 = pneg %p226
        $region42: #{tpu_custom_call.1} parent=27 // pred_check_branch
          %229 = sbr.rel (%p227) target = $region44
        $region43: #{tpu_custom_call.1} parent=27 // pred_region
          %p230 = scmp.eq.s32.totalorder %s23, 0
          // Predicated region
          $region45: #{tpu_custom_call.1} parent=43 // pred_check
            %p231 = pneg %p230
          $region46: #{tpu_custom_call.1} parent=43 // pred_check_branch
            %233 = sbr.rel (%p231) target = $region48
          $region47: #{tpu_custom_call.1} parent=43 // pred_region
            %v234 = vld [vmem:[#allocation2] sm:$0xff]
            %v235 = vrsqrt.pop %v234
            %v236 = vmul.f32 %v235, %v234
            %v237 = vmul.f32 %v236, %v235
            %v238 = vmul.f32 0.5, %v237
            %v239 = vsub.f32 1.5, %v238
            %v240 = vmul.f32 %v235, %v239
            %vm241 = vweird.f32 %v234
            %vm242 = vweird.f32 %v235
            %vm243 = vmor %vm241, %vm242
            %v244 = vsel %vm243, %v235, %v240
            %v245 = vmul.f32 %v244, 128.0
            %vm246 = vcmask 7168
            %247 = vst.msk [vmem:[#allocation2] sm:$0xff] %vm246, %v245
            %248 = vst.msk [vmem:[#allocation3] sm:$0xff] %vm246, -inf
            %249 = vst.msk [vmem:[#allocation4] sm:$0xff] %vm246, 0.0
            %250 = vst.msk [vmem:[#allocation5] sm:$0xff] %vm246, 0.0
          $region48: #{tpu_custom_call.1} parent=43 // pred_fallthru
            _
          %v251 = vld [vmem:[%s196] sm:$0xff]
          %s252 = smul.u32 %s23, 128
          %v253 = vlaneseq
          %v254 = vand.u32 %v253, 127
          %v255 = vstv %s252
          %v256 = vadd.s32 %v255, %v254
          %v257 = vld [vmem:[#allocation2] sm:$0xff]
          %259 = vset.pattern.permute.xlu0 0
          %260 = vperm.xlu0 %259, %v257
          %v261 = vpop.permute.xlu0 %260
          %v263 = vmul.f32 %v201, %v261
          %vm264 = vcmp.lt.s32.totalorder %v256, 320
          %v265 = vsel %vm264, %v263, -inf
          %266 = vset.pattern.permute.xlu0 0
          %267 = vperm.xlu0 %266, %v251
          %v268 = vpop.permute.xlu0 %267
          %vm269 = vcmp.eq.s32.totalorder %v256, %v268
          %v270 = vsel %vm269, %v265, 0.0
          %271 = vadd.xlane.f32.xlu0 %v270
          %v272 = vpop.xlane.xlu0 %271
          %v273 = vmul.f32 %v272, 0.0078125
          %v274 = vmul.f32 %v273, %v273
          %v275 = vsub.f32 1.0, %v274
          %v276 = vrsqrt.pop %v275
          %v277 = vmul.f32 %v276, %v275
          %v278 = vmul.f32 %v277, %v276
          %v279 = vmul.f32 0.5, %v278
          %v280 = vsub.f32 1.5, %v279
          %v281 = vmul.f32 %v276, %v280
          %v282 = vmul.f32 %v275, %v281
          %vm283 = vcmp.eq.f32.partialorder %v275, inf
          %v284 = vsel %vm283, %v275, %v282
          %vm285 = vcmp.eq.f32.partialorder %v275, 0.0
          %v286 = vand.u32 %v275, 2147483648
          %v287 = vsel %vm285, %v286, %v284
          %v288 = vmul.f32 %v273, 0.921061
          %v289 = vmul.f32 %v287, 0.38941833
          %v290 = vsub.f32 %v288, %v289
          %vm291 = vcmp.gt.f32.partialorder %v273, -0.921061
          %v292 = vsub.f32 %v273, 0.15576734
          %v293 = vsel %vm291, %v290, %v292
          %v294 = vmul.f32 %v293, 128.0
          %v295 = vsel %vm269, %v294, %v265
          %vm296 = vcmp.ge.s32.totalorder %v251, %v255
          %s297 = sadd.s32 %s252, 128
          %v298 = vstv %s297
          %vm299 = vcmp.lt.s32.totalorder %v251, %v298
          %vm300 = vmand %vm296, %vm299
          %v301 = vld [vmem:[#allocation5] sm:$0xff]
          %v302 = vsel %vm300, %v294, %v301
          %vm303 = vcmask 7168
          %304 = vst.msk [vmem:[#allocation5] sm:$0xff] %vm303, %v302
          %v305 = vld [vmem:[#allocation3] sm:$0xff]
          %306 = vmax.xlane.f32.xlu0 %v295
          %v307 = vpop.xlane.xlu0 %306
          %v308 = vmax.f32 %v305, %v307
          %v309 = vsub.f32 %v305, %v308
          %v310 = vmul.f32 %v309, 1.442695
          %v311 = vpow.pop %v310
          %v312 = vld [vmem:[#allocation4] sm:$0xff]
          %v313 = vmul.f32 %v311, %v312
          %315 = vset.pattern.permute.xlu0 0
          %316 = vperm.xlu0 %315, %v308
          %v317 = vpop.permute.xlu0 %316
          %v319 = vsub.f32 %v295, %v317
          %v320 = vmul.f32 %v319, 1.442695
          %v321 = vpow.pop %v320
          %322 = vadd.xlane.f32.xlu0 %v321
          %v323 = vpop.xlane.xlu0 %322
          %v324 = vadd.f32 %v313, %v323
          %325 = vst.msk [vmem:[#allocation3] sm:$0xff] %vm303, %v308
          %326 = vst.msk [vmem:[#allocation4] sm:$0xff] %vm303, %v324
          %p327 = scmp.eq.s32.totalorder %s23, 2
          // Predicated region
          $region49: #{tpu_custom_call.1} parent=43 // pred_check
            %p328 = pneg %p327
          $region50: #{tpu_custom_call.1} parent=43 // pred_check_branch
            %330 = sbr.rel (%p328) target = $region52
          $region51: #{tpu_custom_call.1} parent=43 // pred_region
            %v331 = vlog2.pop %v324
            %v332 = vmul.f32 %v331, 0.6931472
            %v333 = vadd.f32 %v308, %v332
            %v334 = vsub.f32 %v333, %v302
            %s335 = smul.u32 %s21, 8
            %v336 = vlaneseq
            %v337 = vshrl.u32 %v336, 7
            %v338 = vstv %s335
            %v339 = vadd.s32 %v338, %v337
            %vm340 = vcmp.lt.s32.totalorder %v339, 12
            %v341 = vsel %vm340, %v334, 0.0
            %342 = vst.msk [vmem:[%s200] sm:$0xff] %vm303, %v341
          $region52: #{tpu_custom_call.1} parent=43 // pred_fallthru
            _
        $region44: #{tpu_custom_call.1} parent=27 // pred_fallthru
          _
        %p343 = scmp.lt.s32.totalorder %s21, 1
        %s344 = scalar_select %p343, %s21, 1
        %s345 = smul.addr %s344, 8
        %s346 = scalar_lea.vmem %s2, %s345
        // Predicated region
        $region53: #{tpu_custom_call.1} parent=27 // pred_check
          %p347 = pneg %p107
        $region54: #{tpu_custom_call.1} parent=27 // pred_check_branch
          %349 = sbr.rel (%p347) target = $region56
        $region55: #{tpu_custom_call.1} parent=27 // pred_region
          _
        $region56: #{tpu_custom_call.1} parent=27 // pred_fallthru
          _
      $region28: #{tpu_custom_call.1} parent=5 // pred_fallthru
        _
      %p350 = scmp.le.s32.totalorder 2, %s11
      // Predicated region
      $region57: #{tpu_custom_call.1} parent=5 // pred_check
        %p351 = pneg %p350
      $region58: #{tpu_custom_call.1} parent=5 // pred_check_branch
        %353 = sbr.rel (%p351) target = $region60
      $region59: #{tpu_custom_call.1} parent=5 // pred_region
        %s354 = ssub.s32 %s11, 2
        // Predicated region
        $region61: #{tpu_custom_call.1} parent=59 // pred_check
          %p355 = pneg %p113
        $region62: #{tpu_custom_call.1} parent=59 // pred_check_branch
          %357 = sbr.rel (%p355) target = $region64
        $region63: #{tpu_custom_call.1} parent=59 // pred_region
          %p358 = scmp.lt.s32.totalorder %s24, 1
          %s359 = scalar_select %p358, %s24, 1
          %s360 = smul.addr %s359, 8
          %s361 = scalar_lea.vmem %s2, %s360
        $region64: #{tpu_custom_call.1} parent=59 // pred_fallthru
          _
      $region60: #{tpu_custom_call.1} parent=5 // pred_fallthru
        _
    $region6: #{tpu_custom_call.1} parent=1 // loop_footer
      %s15 = sadd.s32 1, %s11
    $region7: #{tpu_custom_call.1} parent=1 // loop_footer_branch
      %10 = sbr.rel target = $region3
    $region8: #{tpu_custom_call.1} parent=1 // loop_exit
      _
    %362 = vsyncpa [#allocation7], 1
    %s363 = scalar_lea.sflag [#allocation7], 1
    %364 = vsyncpa %s363, 1

</llo_original>
